<compile_context>
chip_gen: v7x
topology: tpu7x:2x2x1
jax: 0.10.0
libtpu: 0.0.40
codegen_flags: <defaults>
</compile_context>

<pallas_src>
import jax
import jax.numpy as jnp
from jax.experimental import pallas as pl
from jax.experimental.pallas import tpu as pltpu

NEG_SLOPE = 0.1
C_IN = 5      # x channels / SFT condition channels (BatchNorm2d(5))
C_MID = 32    # hidden channels of the 1x1 conv stack (BatchNorm2d(32))
BN_EPS = 1e-5
LANE = 128


def _lrelu(v):
    return jnp.where(v >= 0, v, NEG_SLOPE * v)


# ----------------------------------------------------------------------------
# Kernel: refs are (C, pix_tile) blocks — channels on sublanes, pixels on lanes.
# ----------------------------------------------------------------------------
def snp_kernel(x0_ref, x1_ref,
               bn0_s_ref, bn0_b_ref,      # (C_IN, 1)
               w0_ref, b0_ref,            # (2*C_MID, C_IN), (2*C_MID, 1)   bn_1 folded
               ws1_ref, bs1_ref,          # (C_IN, C_MID), (C_IN, 1)
               wt1_ref, bt1_ref,          # (C_IN, C_MID), (C_IN, 1)
               out_ref):
    # act_scale == act_shift in the reference module -> computed once.
    x1 = x1_ref[...].astype(jnp.float32)                     # (C_IN, tp)
    h = _lrelu(x1 * bn0_s_ref[...] + bn0_b_ref[...])         # bn_0 + LeakyReLU

    # Fused conv0 of both branches (bn_1 already folded into weights/biases):
    # (64, 5) @ (5, tp) -> (64, tp), then LeakyReLU.
    u = jnp.dot(w0_ref[...], h, preferred_element_type=jnp.float32) + b0_ref[...]
    u = _lrelu(u)
    s = u[:C_MID, :]          # scale-branch hidden (32, tp)  -- 8-aligned slice
    t = u[C_MID:, :]          # shift-branch hidden (32, tp)

    scale = jnp.dot(ws1_ref[...], s, preferred_element_type=jnp.float32) + bs1_ref[...]
    shift = jnp.dot(wt1_ref[...], t, preferred_element_type=jnp.float32) + bt1_ref[...]

    x0 = x0_ref[...].astype(jnp.float32)
    # x0 * (scale + 1) + shift  ==  x0*scale + x0 + shift
    out_ref[...] = (x0 * scale + x0 + shift).astype(out_ref.dtype)


# ----------------------------------------------------------------------------
# Parameters: raw (module-style) params + folded/packed kernel params.
# ----------------------------------------------------------------------------
def init_params(key):
    ks = jax.random.split(key, 16)

    def u(k, shape, scale=0.2):
        return jax.random.uniform(k, shape, jnp.float32, -scale, scale)

    # BatchNorm2d(5): gamma, beta, running_mean, running_var
    bn0_gamma = 1.0 + u(ks[0], (C_IN,))
    bn0_beta = u(ks[1], (C_IN,))
    bn0_mean = u(ks[2], (C_IN,))
    bn0_var = 1.0 + jnp.abs(u(ks[3], (C_IN,)))
    # BatchNorm2d(32)
    bn1_gamma = 1.0 + u(ks[4], (C_MID,))
    bn1_beta = u(ks[5], (C_MID,))
    bn1_mean = u(ks[6], (C_MID,))
    bn1_var = 1.0 + jnp.abs(u(ks[7], (C_MID,)))

    # 1x1 conv weights in PyTorch layout (C_out, C_in); distinct keys per tensor.
    w_s0 = u(ks[8], (C_MID, C_IN))
    b_s0 = u(ks[9], (C_MID,), 0.05)
    w_s1 = u(ks[10], (C_IN, C_MID))
    b_s1 = u(ks[11], (C_IN,), 0.05)
    w_t0 = u(ks[12], (C_MID, C_IN))
    b_t0 = u(ks[13], (C_MID,), 0.05)
    w_t1 = u(ks[14], (C_IN, C_MID))
    b_t1 = u(ks[15], (C_IN,), 0.05)

    raw = dict(bn0=(bn0_gamma, bn0_beta, bn0_mean, bn0_var),
               bn1=(bn1_gamma, bn1_beta, bn1_mean, bn1_var),
               w_s0=w_s0, b_s0=b_s0, w_s1=w_s1, b_s1=b_s1,
               w_t0=w_t0, b_t0=b_t0, w_t1=w_t1, b_t1=b_t1)

    # Fold BN running stats into per-channel affines.
    bn0_s = bn0_gamma / jnp.sqrt(bn0_var + BN_EPS)
    bn0_b = bn0_beta - bn0_mean * bn0_s
    bn1_s = bn1_gamma / jnp.sqrt(bn1_var + BN_EPS)
    bn1_b = bn1_beta - bn1_mean * bn1_s

    # Fold bn_1 into conv0:  s1*(W0 x + b0) + b1 = (s1[:,None]*W0) x + (s1*b0 + b1)
    w_s0f = bn1_s[:, None] * w_s0
    b_s0f = bn1_s * b_s0 + bn1_b
    w_t0f = bn1_s[:, None] * w_t0
    b_t0f = bn1_s * b_t0 + bn1_b

    def col(v):  # (C,) -> (C, 1): per-channel params broadcast over the lane axis
        return v.reshape(-1, 1).astype(jnp.float32)

    kparams = dict(
        bn0_s=col(bn0_s), bn0_b=col(bn0_b),
        w0=jnp.concatenate([w_s0f, w_t0f], axis=0).astype(jnp.float32),   # (64, 5)
        b0=col(jnp.concatenate([b_s0f, b_t0f], axis=0)),                  # (64, 1)
        w_s1=w_s1.astype(jnp.float32), b_s1=col(b_s1),
        w_t1=w_t1.astype(jnp.float32), b_t1=col(b_t1),
    )
    return raw, kparams


# ----------------------------------------------------------------------------
# Wrapper
# ----------------------------------------------------------------------------
def snp_forward(x0, x1, kparams, tp=2048, storage_dtype=jnp.float32):
    """x0, x1: NCHW float32 with C == 5. Returns NCHW float32 output."""
    N, C, H, W = x0.shape
    assert C == C_IN and x1.shape == x0.shape
    HW = H * W

    # Pixel tile: large multiple of 128, capped at the (128-rounded) row length.
    hw_ceil = ((HW + LANE - 1) // LANE) * LANE
    tp = max(LANE, min((tp // LANE) * LANE, hw_ceil))
    HW_pad = ((HW + tp - 1) // tp) * tp

    # NCHW -> (N, C, H*W): a pure reshape, no transpose / extra HBM pass.
    x0f = x0.reshape(N, C, HW)
    x1f = x1.reshape(N, C, HW)
    if HW_pad != HW:
        pad = ((0, 0), (0, 0), (0, HW_pad - HW))
        x0f = jnp.pad(x0f, pad)
        x1f = jnp.pad(x1f, pad)
    x0f = x0f.astype(storage_dtype)
    x1f = x1f.astype(storage_dtype)

    # Batch dim squeezed out of the kernel view; block = (C, tp).
    pix_spec = pl.BlockSpec((None, C_IN, tp), lambda n, i: (n, 0, i))

    def full_spec(arr):  # tiny params: full-array, constant-index -> VMEM-resident
        return pl.BlockSpec(arr.shape, lambda n, i: (0, 0))

    param_order = ["bn0_s", "bn0_b", "w0", "b0", "w_s1", "b_s1", "w_t1", "b_t1"]
    param_args = [kparams[k] for k in param_order]

    out_flat = pl.pallas_call(
        snp_kernel,
        out_shape=jax.ShapeDtypeStruct((N, C_IN, HW_pad), jnp.float32),
        grid_spec=pltpu.PrefetchScalarGridSpec(
            num_scalar_prefetch=0,
            grid=(N, HW_pad // tp),
            in_specs=[pix_spec, pix_spec] + [full_spec(a) for a in param_args],
            out_specs=pix_spec,
        ),
        compiler_params=pltpu.CompilerParams(
            dimension_semantics=("parallel", "parallel"),
            vmem_limit_bytes=32 * 1024 * 1024),
    )(x0f, x1f, *param_args)

    return out_flat[:, :, :HW].reshape(N, C_IN, H, W)


# ----------------------------------------------------------------------------
# References
# ----------------------------------------------------------------------------
def _bn_inference(x, gamma, beta, mean, var):
    s = gamma / jnp.sqrt(var + BN_EPS)
    b = beta - mean * s
    return x * s[None, :, None, None] + b[None, :, None, None]


def _conv1x1(x, w, b):  # x: NCHW, w: (C_out, C_in), b: (C_out,)
    return jnp.einsum("oi,nihw->nohw", w, x) + b[None, :, None, None]


def snp_reference_module(x0, x1, raw):
    """Faithful transcription of the PyTorch module (inference-mode BN)."""
    h = _lrelu(_bn_inference(x1, *raw["bn0"]))  # act_scale == act_shift
    s = _conv1x1(h, raw["w_s0"], raw["b_s0"])
    s = _lrelu(_bn_inference(s, *raw["bn1"]))
    scale = _conv1x1(s, raw["w_s1"], raw["b_s1"])
    t = _conv1x1(h, raw["w_t0"], raw["b_t0"])
    t = _lrelu(_bn_inference(t, *raw["bn1"]))
    shift = _conv1x1(t, raw["w_t1"], raw["b_t1"])
    return x0 * (scale + 1.0) + shift


def snp_reference_folded(x0, x1, kp):
    """Plain-JAX version of the exact folded/fused math the kernel runs."""
    N, C, H, W = x0.shape
    x0f = x0.reshape(N, C, H * W)
    x1f = x1.reshape(N, C, H * W)
    h = _lrelu(x1f * kp["bn0_s"][None] + kp["bn0_b"][None])
    u = _lrelu(jnp.einsum("oi,nip->nop", kp["w0"], h) + kp["b0"][None])
    scale = jnp.einsum("oi,nip->nop", kp["w_s1"], u[:, :C_MID]) + kp["b_s1"][None]
    shift = jnp.einsum("oi,nip->nop", kp["w_t1"], u[:, C_MID:]) + kp["b_t1"][None]
    return (x0f * scale + x0f + shift).reshape(N, C, H, W)


if __name__ == "__main__":
    key = jax.random.PRNGKey(0)
    k0, k1, kp_key = jax.random.split(key, 3)

    N, H, W = 2, 16, 16
    # forward receives x as a pair: x[0] is the content feature, x[1] the condition
    x0 = jax.random.normal(k0, (N, C_IN, H, W), jnp.float32)
    x1 = jax.random.normal(k1, (N, C_IN, H, W), jnp.float32)

    raw, kparams = init_params(kp_key)

    out = jax.block_until_ready(snp_forward(x0, x1, kparams))
    assert out.shape == (N, C_IN, H, W)

    # Tight check against a plain-JAX copy of the exact kernel math.
    ref_folded = snp_reference_folded(x0, x1, kparams)
    assert jnp.allclose(out, ref_folded, atol=1e-4, rtol=1e-4), "mismatch vs folded ref"

    # Module-faithful check (bn_1 applied after conv0, branches separate).
    # Folding bn_1 into the conv weights is exact in real arithmetic but not
    # bitwise identical under reduced-precision default matmuls -> looser tol.
    ref_module = snp_reference_module(x0, x1, raw)
    assert jnp.allclose(out, ref_module, atol=5e-2, rtol=5e-2), "mismatch vs module ref"

    # bf16 storage/DMA path (bandwidth lever on v6e/v7x); compute stays f32.
    out_bf16 = jax.block_until_ready(
        snp_forward(x0, x1, kparams, storage_dtype=jnp.bfloat16))
    assert jnp.allclose(out_bf16, ref_folded, atol=5e-2, rtol=5e-2), "bf16 path mismatch"

    print("KERNEL_OK")
</pallas_src>

<mosaic_0001>
module attributes {stable_mosaic.version = 11 : i64} {
  func.func @snp_kernel(%arg0: i32, %arg1: i32, %arg2: memref<1x5x256xf32, #tpu.memory_space<vmem>>, %arg3: memref<1x5x256xf32, #tpu.memory_space<vmem>>, %arg4: memref<5x1xf32, #tpu.memory_space<vmem>>, %arg5: memref<5x1xf32, #tpu.memory_space<vmem>>, %arg6: memref<64x5xf32, #tpu.memory_space<vmem>>, %arg7: memref<64x1xf32, #tpu.memory_space<vmem>>, %arg8: memref<5x32xf32, #tpu.memory_space<vmem>>, %arg9: memref<5x1xf32, #tpu.memory_space<vmem>>, %arg10: memref<5x32xf32, #tpu.memory_space<vmem>>, %arg11: memref<5x1xf32, #tpu.memory_space<vmem>>, %arg12: memref<1x5x256xf32, #tpu.memory_space<vmem>>) attributes {dimension_semantics = [#tpu.dimension_semantics<parallel>, #tpu.dimension_semantics<parallel>], iteration_bounds = array<i64: 2, 1>, scalar_prefetch = 0 : i64, scratch_operands = 0 : i64, tpu.core_type = #tpu.core_type<tc>, window_params = [{transform_indices = @transform_0, window_bounds = array<i64: 1, 5, 256>}, {transform_indices = @transform_1, window_bounds = array<i64: 1, 5, 256>}, {pipeline_mode = #tpu.pipeline_mode<synchronous>, transform_indices = @transform_2, window_bounds = array<i64: 5, 1>}, {pipeline_mode = #tpu.pipeline_mode<synchronous>, transform_indices = @transform_3, window_bounds = array<i64: 5, 1>}, {pipeline_mode = #tpu.pipeline_mode<synchronous>, transform_indices = @transform_4, window_bounds = array<i64: 64, 5>}, {pipeline_mode = #tpu.pipeline_mode<synchronous>, transform_indices = @transform_5, window_bounds = array<i64: 64, 1>}, {pipeline_mode = #tpu.pipeline_mode<synchronous>, transform_indices = @transform_6, window_bounds = array<i64: 5, 32>}, {pipeline_mode = #tpu.pipeline_mode<synchronous>, transform_indices = @transform_7, window_bounds = array<i64: 5, 1>}, {pipeline_mode = #tpu.pipeline_mode<synchronous>, transform_indices = @transform_8, window_bounds = array<i64: 5, 32>}, {pipeline_mode = #tpu.pipeline_mode<synchronous>, transform_indices = @transform_9, window_bounds = array<i64: 5, 1>}, {transform_indices = @transform_10, window_bounds = array<i64: 1, 5, 256>}]} {
    %c0 = arith.constant 0 : index
    %c0_0 = arith.constant 0 : index
    %c0_1 = arith.constant 0 : index
    %0 = vector.load %arg3[%c0, %c0_0, %c0_1] : memref<1x5x256xf32, #tpu.memory_space<vmem>>, vector<1x5x256xf32>
    %1 = vector.shape_cast %0 : vector<1x5x256xf32> to vector<5x256xf32>
    %c0_2 = arith.constant 0 : index
    %c0_3 = arith.constant 0 : index
    %2 = vector.load %arg4[%c0_2, %c0_3] : memref<5x1xf32, #tpu.memory_space<vmem>>, vector<5x1xf32>
    %3 = vector.broadcast %2 : vector<5x1xf32> to vector<5x256xf32>
    %4 = arith.mulf %1, %3 : vector<5x256xf32>
    %c0_4 = arith.constant 0 : index
    %c0_5 = arith.constant 0 : index
    %5 = vector.load %arg5[%c0_4, %c0_5] : memref<5x1xf32, #tpu.memory_space<vmem>>, vector<5x1xf32>
    %6 = vector.broadcast %5 : vector<5x1xf32> to vector<5x256xf32>
    %7 = arith.addf %4, %6 : vector<5x256xf32>
    %cst = arith.constant 0.000000e+00 : f32
    %8 = vector.broadcast %cst : f32 to vector<5x256xf32>
    %9 = arith.cmpf oge, %7, %8 : vector<5x256xf32>
    %cst_6 = arith.constant 1.000000e-01 : f32
    %10 = vector.broadcast %cst_6 : f32 to vector<5x256xf32>
    %11 = arith.mulf %10, %7 : vector<5x256xf32>
    %12 = arith.select %9, %7, %11 : vector<5x256xi1>, vector<5x256xf32>
    %c0_7 = arith.constant 0 : index
    %c0_8 = arith.constant 0 : index
    %13 = vector.load %arg6[%c0_7, %c0_8] : memref<64x5xf32, #tpu.memory_space<vmem>>, vector<64x5xf32>
    %cst_9 = arith.constant dense<0.000000e+00> : vector<64x256xf32>
    %14 = tpu.matmul %13, %12, %cst_9 {dimension_numbers = #tpu.dot_dimension_numbers<[1], [0], [0], [1], [0, 0, 1, 1], [], []>} : vector<64x5xf32>, vector<5x256xf32>, vector<64x256xf32> -> vector<64x256xf32>
    %c0_10 = arith.constant 0 : index
    %c0_11 = arith.constant 0 : index
    %15 = vector.load %arg7[%c0_10, %c0_11] : memref<64x1xf32, #tpu.memory_space<vmem>>, vector<64x1xf32>
    %16 = vector.broadcast %15 : vector<64x1xf32> to vector<64x256xf32>
    %17 = arith.addf %14, %16 : vector<64x256xf32>
    %cst_12 = arith.constant 0.000000e+00 : f32
    %18 = vector.broadcast %cst_12 : f32 to vector<64x256xf32>
    %19 = arith.cmpf oge, %17, %18 : vector<64x256xf32>
    %cst_13 = arith.constant 1.000000e-01 : f32
    %20 = vector.broadcast %cst_13 : f32 to vector<64x256xf32>
    %21 = arith.mulf %20, %17 : vector<64x256xf32>
    %22 = arith.select %19, %17, %21 : vector<64x256xi1>, vector<64x256xf32>
    %23 = vector.extract_strided_slice %22 {offsets = [0, 0], sizes = [32, 256], strides = [1, 1]} : vector<64x256xf32> to vector<32x256xf32>
    %24 = vector.extract_strided_slice %22 {offsets = [32, 0], sizes = [32, 256], strides = [1, 1]} : vector<64x256xf32> to vector<32x256xf32>
    %c0_14 = arith.constant 0 : index
    %c0_15 = arith.constant 0 : index
    %25 = vector.load %arg8[%c0_14, %c0_15] : memref<5x32xf32, #tpu.memory_space<vmem>>, vector<5x32xf32>
    %cst_16 = arith.constant dense<0.000000e+00> : vector<5x256xf32>
    %26 = tpu.matmul %25, %23, %cst_16 {dimension_numbers = #tpu.dot_dimension_numbers<[1], [0], [0], [1], [0, 0, 1, 1], [], []>} : vector<5x32xf32>, vector<32x256xf32>, vector<5x256xf32> -> vector<5x256xf32>
    %c0_17 = arith.constant 0 : index
    %c0_18 = arith.constant 0 : index
    %27 = vector.load %arg9[%c0_17, %c0_18] : memref<5x1xf32, #tpu.memory_space<vmem>>, vector<5x1xf32>
    %28 = vector.broadcast %27 : vector<5x1xf32> to vector<5x256xf32>
    %29 = arith.addf %26, %28 : vector<5x256xf32>
    %c0_19 = arith.constant 0 : index
    %c0_20 = arith.constant 0 : index
    %30 = vector.load %arg10[%c0_19, %c0_20] : memref<5x32xf32, #tpu.memory_space<vmem>>, vector<5x32xf32>
    %cst_21 = arith.constant dense<0.000000e+00> : vector<5x256xf32>
    %31 = tpu.matmul %30, %24, %cst_21 {dimension_numbers = #tpu.dot_dimension_numbers<[1], [0], [0], [1], [0, 0, 1, 1], [], []>} : vector<5x32xf32>, vector<32x256xf32>, vector<5x256xf32> -> vector<5x256xf32>
    %c0_22 = arith.constant 0 : index
    %c0_23 = arith.constant 0 : index
    %32 = vector.load %arg11[%c0_22, %c0_23] : memref<5x1xf32, #tpu.memory_space<vmem>>, vector<5x1xf32>
    %33 = vector.broadcast %32 : vector<5x1xf32> to vector<5x256xf32>
    %34 = arith.addf %31, %33 : vector<5x256xf32>
    %c0_24 = arith.constant 0 : index
    %c0_25 = arith.constant 0 : index
    %c0_26 = arith.constant 0 : index
    %35 = vector.load %arg2[%c0_24, %c0_25, %c0_26] : memref<1x5x256xf32, #tpu.memory_space<vmem>>, vector<1x5x256xf32>
    %36 = vector.shape_cast %35 : vector<1x5x256xf32> to vector<5x256xf32>
    %37 = arith.mulf %36, %29 : vector<5x256xf32>
    %38 = arith.addf %37, %36 : vector<5x256xf32>
    %39 = arith.addf %38, %34 : vector<5x256xf32>
    %c0_27 = arith.constant 0 : index
    %c0_28 = arith.constant 0 : index
    %c0_29 = arith.constant 0 : index
    %40 = vector.load %arg12[%c0_27, %c0_28, %c0_29] : memref<1x5x256xf32, #tpu.memory_space<vmem>>, vector<1x5x256xf32>
    %41 = vector.shape_cast %40 : vector<1x5x256xf32> to vector<5x256xf32>
    %42 = vector.shape_cast %39 : vector<5x256xf32> to vector<1x5x256xf32>
    tpu.vector_store %arg12[%c0_27, %c0_28, %c0_29], %42 {strides = array<i32>} : memref<1x5x256xf32, #tpu.memory_space<vmem>>, vector<1x5x256xf32>,
    return
  }
  func.func @transform_0(%arg0: i32, %arg1: i32) -> (i32, i32, i32) {
    %c0_i32 = arith.constant 0 : i32
    %c0_i32_0 = arith.constant 0 : i32
    return %arg0, %c0_i32, %arg1 : i32, i32, i32
  }
  func.func @transform_1(%arg0: i32, %arg1: i32) -> (i32, i32, i32) {
    %c0_i32 = arith.constant 0 : i32
    %c0_i32_0 = arith.constant 0 : i32
    return %arg0, %c0_i32, %arg1 : i32, i32, i32
  }
  func.func @transform_2(%arg0: i32, %arg1: i32) -> (i32, i32) {
    %c0_i32 = arith.constant 0 : i32
    %c0_i32_0 = arith.constant 0 : i32
    %c0_i32_1 = arith.constant 0 : i32
    return %c0_i32, %c0_i32_0 : i32, i32
  }
  func.func @transform_3(%arg0: i32, %arg1: i32) -> (i32, i32) {
    %c0_i32 = arith.constant 0 : i32
    %c0_i32_0 = arith.constant 0 : i32
    %c0_i32_1 = arith.constant 0 : i32
    return %c0_i32, %c0_i32_0 : i32, i32
  }
  func.func @transform_4(%arg0: i32, %arg1: i32) -> (i32, i32) {
    %c0_i32 = arith.constant 0 : i32
    %c0_i32_0 = arith.constant 0 : i32
    %c0_i32_1 = arith.constant 0 : i32
    return %c0_i32, %c0_i32_0 : i32, i32
  }
  func.func @transform_5(%arg0: i32, %arg1: i32) -> (i32, i32) {
    %c0_i32 = arith.constant 0 : i32
    %c0_i32_0 = arith.constant 0 : i32
    %c0_i32_1 = arith.constant 0 : i32
    return %c0_i32, %c0_i32_0 : i32, i32
  }
  func.func @transform_6(%arg0: i32, %arg1: i32) -> (i32, i32) {
    %c0_i32 = arith.constant 0 : i32
    %c0_i32_0 = arith.constant 0 : i32
    %c0_i32_1 = arith.constant 0 : i32
    return %c0_i32, %c0_i32_0 : i32, i32
  }
  func.func @transform_7(%arg0: i32, %arg1: i32) -> (i32, i32) {
    %c0_i32 = arith.constant 0 : i32
    %c0_i32_0 = arith.constant 0 : i32
    %c0_i32_1 = arith.constant 0 : i32
    return %c0_i32, %c0_i32_0 : i32, i32
  }
  func.func @transform_8(%arg0: i32, %arg1: i32) -> (i32, i32) {
    %c0_i32 = arith.constant 0 : i32
    %c0_i32_0 = arith.constant 0 : i32
    %c0_i32_1 = arith.constant 0 : i32
    return %c0_i32, %c0_i32_0 : i32, i32
  }
  func.func @transform_9(%arg0: i32, %arg1: i32) -> (i32, i32) {
    %c0_i32 = arith.constant 0 : i32
    %c0_i32_0 = arith.constant 0 : i32
    %c0_i32_1 = arith.constant 0 : i32
    return %c0_i32, %c0_i32_0 : i32, i32
  }
  func.func @transform_10(%arg0: i32, %arg1: i32) -> (i32, i32, i32) {
    %c0_i32 = arith.constant 0 : i32
    %c0_i32_0 = arith.constant 0 : i32
    return %arg0, %c0_i32, %arg1 : i32, i32, i32
  }
}

</mosaic_0001>

<llo_original>
// kernel: tpu_custom_call.1
$region0: #{tpu_custom_call.1}
  #allocation0 [shape = 'u32[]', space=smem, size = 0x4, offset = 0x4, fixed_abs, tag = 'smem constant byte address 0x4 - core index']
  #allocation1 [shape = 'u32[144,128]{1,0:T(1,128)}', space=vmem, size = 0x12000, scoped, tag = 'internal scratch']
  %s0 = inlined_call_operand.vmem [shape: f32[2,5,256], index: 0, kind: input, shape index: {}]
  %s1 = inlined_call_operand.vmem [shape: f32[2,5,256], index: 1, kind: input, shape index: {}]
  %s2 = inlined_call_operand.vmem [shape: f32[5,1], index: 2, kind: input, shape index: {}]
  %s3 = inlined_call_operand.vmem [shape: f32[5,1], index: 3, kind: input, shape index: {}]
  %s4 = inlined_call_operand.vmem [shape: f32[64,5], index: 4, kind: input, shape index: {}]
  %s5 = inlined_call_operand.vmem [shape: f32[64,1], index: 5, kind: input, shape index: {}]
  %s6 = inlined_call_operand.vmem [shape: f32[5,32], index: 6, kind: input, shape index: {}]
  %s7 = inlined_call_operand.vmem [shape: f32[5,1], index: 7, kind: input, shape index: {}]
  %s8 = inlined_call_operand.vmem [shape: f32[5,32], index: 8, kind: input, shape index: {}]
  %s9 = inlined_call_operand.vmem [shape: f32[5,1], index: 9, kind: input, shape index: {}]
  %s10 = inlined_call_operand.vmem [shape: f32[2,5,256], index: 10, kind: output, shape index: {}]
  %s11 = sld [smem:[#allocation0]]
  $region73: #{tpu_custom_call.1} parent=0
    _
  %s13 = ssub.s32 1, %s11
  %s14 = scalar_select 0, %s13, %s11
  loop: start=0, step=1, limit=4
  $region2: #{tpu_custom_call.1} parent=0 // loop_pre_header
    _
  $region3: #{tpu_custom_call.1} parent=0 // loop_header
    %s16 = sphi 0, %s20
    %p17 = scmp.ge.s32.totalorder %s16, 4
    %s23 = sphi 0, %s35
    %s24 = sphi 0, %s31
    %s25 = sphi 0, %s23
    %s26 = sphi 0, %s24
    %s27 = sphi 0, %s25
    %s28 = sphi 0, %s26
    %s40 = sphi 0, %s42
    %s43 = sphi 0, %s40
    %s44 = sphi 0, %s43
    %s60 = sphi 0, %s44
    %s68 = sphi 0, %s70
    %s71 = sphi 0, %s68
    %s72 = sphi 0, %s71
    %s88 = sphi 0, %s72
    %s92 = sphi 0, %s92
    %s94 = sphi 0, %s92
    %s95 = sphi 0, %s94
    %s109 = sphi 0, %s95
    %s113 = sphi 0, %s113
    %s115 = sphi 0, %s113
    %s116 = sphi 0, %s115
    %s130 = sphi 0, %s116
    %s134 = sphi 0, %s134
    %s136 = sphi 0, %s134
    %s137 = sphi 0, %s136
    %s151 = sphi 0, %s137
    %s155 = sphi 0, %s155
    %s157 = sphi 0, %s155
    %s158 = sphi 0, %s157
    %s172 = sphi 0, %s158
    %s176 = sphi 0, %s176
    %s178 = sphi 0, %s176
    %s179 = sphi 0, %s178
    %s193 = sphi 0, %s179
    %s197 = sphi 0, %s197
    %s199 = sphi 0, %s197
    %s200 = sphi 0, %s199
    %s214 = sphi 0, %s200
    %s218 = sphi 0, %s218
    %s220 = sphi 0, %s218
    %s221 = sphi 0, %s220
    %s235 = sphi 0, %s221
    %s239 = sphi 0, %s239
    %s241 = sphi 0, %s239
    %s242 = sphi 0, %s241
    %s256 = sphi 0, %s242
    %s264 = sphi 0, %s266
    %s267 = sphi 0, %s264
    %s268 = sphi 0, %s267
    %s284 = sphi 0, %s268
  $region4: #{tpu_custom_call.1} parent=0 // loop_header_branch
    %19 = sbr.rel (%p17) target = $region8
  $region5: #{tpu_custom_call.1} parent=0 // loop_body
    %s21 = ssub.s32 %s16, 1
    %s22 = ssub.s32 %s16, 2
    %s29 = sadd.s32 1, %s24
    %p30 = scmp.ge.s32.totalorder %s29, 1
    %s31 = scalar_select %p30, 0, %s29
    %s32 = sadd.s32 1, %s23
    %s33 = scalar_select %p30, %s32, %s23
    %p34 = scmp.ge.s32.totalorder %s33, 2
    %s35 = scalar_select %p34, 0, %s33
    %s36 = ssub.s32 %s23, %s35
    %s37 = ssub.s32 %s24, %s31
    %s38 = sor.u32 %s36, %s37
    %p39 = scmp.eq.s32.totalorder %s38, 0
    %s41 = sadd.s32 %s40, 1
    %s42 = scalar_select %p39, %s40, %s41
    %p45 = pneg %p39
    %p46 = scmp.eq.s32.totalorder %s16, 1
    %p47 = por %p45, %p46
    %p48 = scmp.ne.s32.totalorder %s40, %s43
    %p49 = scmp.eq.s32.totalorder %s16, 0
    %p50 = por %p48, %p49
    %p51 = scmp.ne.s32.totalorder %s40, %s43
    %p52 = scmp.eq.s32.totalorder %s21, 1
    %p53 = por %p51, %p52
    %p54 = scmp.ne.s32.totalorder %s43, %s44
    %p55 = scmp.eq.s32.totalorder %s21, 0
    %p56 = por %p54, %p55
    %p57 = scmp.ne.s32.totalorder %s43, %s44
    %p58 = scmp.eq.s32.totalorder %s22, 1
    %p59 = por %p57, %p58
    %p61 = scmp.ne.s32.totalorder %s44, %s60
    %p62 = scmp.eq.s32.totalorder %s22, 0
    %p63 = por %p61, %p62
    %s64 = ssub.s32 %s23, %s35
    %s65 = ssub.s32 %s24, %s31
    %s66 = sor.u32 %s64, %s65
    %p67 = scmp.eq.s32.totalorder %s66, 0
    %s69 = sadd.s32 %s68, 1
    %s70 = scalar_select %p67, %s68, %s69
    %p73 = pneg %p67
    %p74 = scmp.eq.s32.totalorder %s16, 1
    %p75 = por %p73, %p74
    %p76 = scmp.ne.s32.totalorder %s68, %s71
    %p77 = scmp.eq.s32.totalorder %s16, 0
    %p78 = por %p76, %p77
    %p79 = scmp.ne.s32.totalorder %s68, %s71
    %p80 = scmp.eq.s32.totalorder %s21, 1
    %p81 = por %p79, %p80
    %p82 = scmp.ne.s32.totalorder %s71, %s72
    %p83 = scmp.eq.s32.totalorder %s21, 0
    %p84 = por %p82, %p83
    %p85 = scmp.ne.s32.totalorder %s71, %s72
    %p86 = scmp.eq.s32.totalorder %s22, 1
    %p87 = por %p85, %p86
    %p89 = scmp.ne.s32.totalorder %s72, %s88
    %p90 = scmp.eq.s32.totalorder %s22, 0
    %p91 = por %p89, %p90
    %s93 = sadd.s32 %s92, 1
    %p96 = scmp.eq.s32.totalorder %s16, 1
    %p97 = scmp.ne.s32.totalorder %s92, %s94
    %p98 = scmp.eq.s32.totalorder %s16, 0
    %p99 = por %p97, %p98
    %p100 = scmp.ne.s32.totalorder %s92, %s94
    %p101 = scmp.eq.s32.totalorder %s21, 1
    %p102 = por %p100, %p101
    %p103 = scmp.ne.s32.totalorder %s94, %s95
    %p104 = scmp.eq.s32.totalorder %s21, 0
    %p105 = por %p103, %p104
    %p106 = scmp.ne.s32.totalorder %s94, %s95
    %p107 = scmp.eq.s32.totalorder %s22, 1
    %p108 = por %p106, %p107
    %p110 = scmp.ne.s32.totalorder %s95, %s109
    %p111 = scmp.eq.s32.totalorder %s22, 0
    %p112 = por %p110, %p111
    %s114 = sadd.s32 %s113, 1
    %p117 = scmp.eq.s32.totalorder %s16, 1
    %p118 = scmp.ne.s32.totalorder %s113, %s115
    %p119 = scmp.eq.s32.totalorder %s16, 0
    %p120 = por %p118, %p119
    %p121 = scmp.ne.s32.totalorder %s113, %s115
    %p122 = scmp.eq.s32.totalorder %s21, 1
    %p123 = por %p121, %p122
    %p124 = scmp.ne.s32.totalorder %s115, %s116
    %p125 = scmp.eq.s32.totalorder %s21, 0
    %p126 = por %p124, %p125
    %p127 = scmp.ne.s32.totalorder %s115, %s116
    %p128 = scmp.eq.s32.totalorder %s22, 1
    %p129 = por %p127, %p128
    %p131 = scmp.ne.s32.totalorder %s116, %s130
    %p132 = scmp.eq.s32.totalorder %s22, 0
    %p133 = por %p131, %p132
    %s135 = sadd.s32 %s134, 1
    %p138 = scmp.eq.s32.totalorder %s16, 1
    %p139 = scmp.ne.s32.totalorder %s134, %s136
    %p140 = scmp.eq.s32.totalorder %s16, 0
    %p141 = por %p139, %p140
    %p142 = scmp.ne.s32.totalorder %s134, %s136
    %p143 = scmp.eq.s32.totalorder %s21, 1
    %p144 = por %p142, %p143
    %p145 = scmp.ne.s32.totalorder %s136, %s137
    %p146 = scmp.eq.s32.totalorder %s21, 0
    %p147 = por %p145, %p146
    %p148 = scmp.ne.s32.totalorder %s136, %s137
    %p149 = scmp.eq.s32.totalorder %s22, 1
    %p150 = por %p148, %p149
    %p152 = scmp.ne.s32.totalorder %s137, %s151
    %p153 = scmp.eq.s32.totalorder %s22, 0
    %p154 = por %p152, %p153
    %s156 = sadd.s32 %s155, 1
    %p159 = scmp.eq.s32.totalorder %s16, 1
    %p160 = scmp.ne.s32.totalorder %s155, %s157
    %p161 = scmp.eq.s32.totalorder %s16, 0
    %p162 = por %p160, %p161
    %p163 = scmp.ne.s32.totalorder %s155, %s157
    %p164 = scmp.eq.s32.totalorder %s21, 1
    %p165 = por %p163, %p164
    %p166 = scmp.ne.s32.totalorder %s157, %s158
    %p167 = scmp.eq.s32.totalorder %s21, 0
    %p168 = por %p166, %p167
    %p169 = scmp.ne.s32.totalorder %s157, %s158
    %p170 = scmp.eq.s32.totalorder %s22, 1
    %p171 = por %p169, %p170
    %p173 = scmp.ne.s32.totalorder %s158, %s172
    %p174 = scmp.eq.s32.totalorder %s22, 0
    %p175 = por %p173, %p174
    %s177 = sadd.s32 %s176, 1
    %p180 = scmp.eq.s32.totalorder %s16, 1
    %p181 = scmp.ne.s32.totalorder %s176, %s178
    %p182 = scmp.eq.s32.totalorder %s16, 0
    %p183 = por %p181, %p182
    %p184 = scmp.ne.s32.totalorder %s176, %s178
    %p185 = scmp.eq.s32.totalorder %s21, 1
    %p186 = por %p184, %p185
    %p187 = scmp.ne.s32.totalorder %s178, %s179
    %p188 = scmp.eq.s32.totalorder %s21, 0
    %p189 = por %p187, %p188
    %p190 = scmp.ne.s32.totalorder %s178, %s179
    %p191 = scmp.eq.s32.totalorder %s22, 1
    %p192 = por %p190, %p191
    %p194 = scmp.ne.s32.totalorder %s179, %s193
    %p195 = scmp.eq.s32.totalorder %s22, 0
    %p196 = por %p194, %p195
    %s198 = sadd.s32 %s197, 1
    %p201 = scmp.eq.s32.totalorder %s16, 1
    %p202 = scmp.ne.s32.totalorder %s197, %s199
    %p203 = scmp.eq.s32.totalorder %s16, 0
    %p204 = por %p202, %p203
    %p205 = scmp.ne.s32.totalorder %s197, %s199
    %p206 = scmp.eq.s32.totalorder %s21, 1
    %p207 = por %p205, %p206
    %p208 = scmp.ne.s32.totalorder %s199, %s200
    %p209 = scmp.eq.s32.totalorder %s21, 0
    %p210 = por %p208, %p209
    %p211 = scmp.ne.s32.totalorder %s199, %s200
    %p212 = scmp.eq.s32.totalorder %s22, 1
    %p213 = por %p211, %p212
    %p215 = scmp.ne.s32.totalorder %s200, %s214
    %p216 = scmp.eq.s32.totalorder %s22, 0
    %p217 = por %p215, %p216
    %s219 = sadd.s32 %s218, 1
    %p222 = scmp.eq.s32.totalorder %s16, 1
    %p223 = scmp.ne.s32.totalorder %s218, %s220
    %p224 = scmp.eq.s32.totalorder %s16, 0
    %p225 = por %p223, %p224
    %p226 = scmp.ne.s32.totalorder %s218, %s220
    %p227 = scmp.eq.s32.totalorder %s21, 1
    %p228 = por %p226, %p227
    %p229 = scmp.ne.s32.totalorder %s220, %s221
    %p230 = scmp.eq.s32.totalorder %s21, 0
    %p231 = por %p229, %p230
    %p232 = scmp.ne.s32.totalorder %s220, %s221
    %p233 = scmp.eq.s32.totalorder %s22, 1
    %p234 = por %p232, %p233
    %p236 = scmp.ne.s32.totalorder %s221, %s235
    %p237 = scmp.eq.s32.totalorder %s22, 0
    %p238 = por %p236, %p237
    %s240 = sadd.s32 %s239, 1
    %p243 = scmp.eq.s32.totalorder %s16, 1
    %p244 = scmp.ne.s32.totalorder %s239, %s241
    %p245 = scmp.eq.s32.totalorder %s16, 0
    %p246 = por %p244, %p245
    %p247 = scmp.ne.s32.totalorder %s239, %s241
    %p248 = scmp.eq.s32.totalorder %s21, 1
    %p249 = por %p247, %p248
    %p250 = scmp.ne.s32.totalorder %s241, %s242
    %p251 = scmp.eq.s32.totalorder %s21, 0
    %p252 = por %p250, %p251
    %p253 = scmp.ne.s32.totalorder %s241, %s242
    %p254 = scmp.eq.s32.totalorder %s22, 1
    %p255 = por %p253, %p254
    %p257 = scmp.ne.s32.totalorder %s242, %s256
    %p258 = scmp.eq.s32.totalorder %s22, 0
    %p259 = por %p257, %p258
    %s260 = ssub.s32 %s23, %s35
    %s261 = ssub.s32 %s24, %s31
    %s262 = sor.u32 %s260, %s261
    %p263 = scmp.eq.s32.totalorder %s262, 0
    %s265 = sadd.s32 %s264, 1
    %s266 = scalar_select %p263, %s264, %s265
    %p269 = pneg %p263
    %p270 = scmp.eq.s32.totalorder %s16, 1
    %p271 = por %p269, %p270
    %p272 = scmp.ne.s32.totalorder %s264, %s267
    %p273 = scmp.eq.s32.totalorder %s16, 0
    %p274 = por %p272, %p273
    %p275 = scmp.ne.s32.totalorder %s264, %s267
    %p276 = scmp.eq.s32.totalorder %s21, 1
    %p277 = por %p275, %p276
    %p278 = scmp.ne.s32.totalorder %s267, %s268
    %p279 = scmp.eq.s32.totalorder %s21, 0
    %p280 = por %p278, %p279
    %p281 = scmp.ne.s32.totalorder %s267, %s268
    %p282 = scmp.eq.s32.totalorder %s22, 1
    %p283 = por %p281, %p282
    %p285 = scmp.ne.s32.totalorder %s268, %s284
    %p286 = scmp.eq.s32.totalorder %s22, 0
    %p287 = por %p285, %p286
    %p288 = scmp.le.s32.totalorder 1, %s16
    %p289 = scmp.lt.s32.totalorder %s16, 3
    %p290 = pnand %p288, %p289
    %p291 = pneg %p290
    // Predicated region
    $region9: #{tpu_custom_call.1} parent=5 // pred_check
      _
    $region10: #{tpu_custom_call.1} parent=5 // pred_check_branch
      %293 = sbr.rel (%p290) target = $region12
    $region11: #{tpu_custom_call.1} parent=5 // pred_region
      %s294 = ssub.s32 %s16, 1
      // Predicated region
      $region13: #{tpu_custom_call.1} parent=11 // pred_check
        %p295 = pneg %p105
      $region14: #{tpu_custom_call.1} parent=11 // pred_check_branch
        %297 = sbr.rel (%p295) target = $region16
      $region15: #{tpu_custom_call.1} parent=11 // pred_region
        _
      $region16: #{tpu_custom_call.1} parent=11 // pred_fallthru
        _
      // Predicated region
      $region17: #{tpu_custom_call.1} parent=11 // pred_check
        %p298 = pneg %p126
      $region18: #{tpu_custom_call.1} parent=11 // pred_check_branch
        %300 = sbr.rel (%p298) target = $region20
      $region19: #{tpu_custom_call.1} parent=11 // pred_region
        _
      $region20: #{tpu_custom_call.1} parent=11 // pred_fallthru
        _
      // Predicated region
      $region21: #{tpu_custom_call.1} parent=11 // pred_check
        %p301 = pneg %p147
      $region22: #{tpu_custom_call.1} parent=11 // pred_check_branch
        %303 = sbr.rel (%p301) target = $region24
      $region23: #{tpu_custom_call.1} parent=11 // pred_region
        _
      $region24: #{tpu_custom_call.1} parent=11 // pred_fallthru
        _
      // Predicated region
      $region25: #{tpu_custom_call.1} parent=11 // pred_check
        %p304 = pneg %p168
      $region26: #{tpu_custom_call.1} parent=11 // pred_check_branch
        %306 = sbr.rel (%p304) target = $region28
      $region27: #{tpu_custom_call.1} parent=11 // pred_region
        _
      $region28: #{tpu_custom_call.1} parent=11 // pred_fallthru
        _
      // Predicated region
      $region29: #{tpu_custom_call.1} parent=11 // pred_check
        %p307 = pneg %p189
      $region30: #{tpu_custom_call.1} parent=11 // pred_check_branch
        %309 = sbr.rel (%p307) target = $region32
      $region31: #{tpu_custom_call.1} parent=11 // pred_region
        _
      $region32: #{tpu_custom_call.1} parent=11 // pred_fallthru
        _
      // Predicated region
      $region33: #{tpu_custom_call.1} parent=11 // pred_check
        %p310 = pneg %p210
      $region34: #{tpu_custom_call.1} parent=11 // pred_check_branch
        %312 = sbr.rel (%p310) target = $region36
      $region35: #{tpu_custom_call.1} parent=11 // pred_region
        _
      $region36: #{tpu_custom_call.1} parent=11 // pred_fallthru
        _
      // Predicated region
      $region37: #{tpu_custom_call.1} parent=11 // pred_check
        %p313 = pneg %p231
      $region38: #{tpu_custom_call.1} parent=11 // pred_check_branch
        %315 = sbr.rel (%p313) target = $region40
      $region39: #{tpu_custom_call.1} parent=11 // pred_region
        _
      $region40: #{tpu_custom_call.1} parent=11 // pred_fallthru
        _
      // Predicated region
      $region41: #{tpu_custom_call.1} parent=11 // pred_check
        %p316 = pneg %p252
      $region42: #{tpu_custom_call.1} parent=11 // pred_check_branch
        %318 = sbr.rel (%p316) target = $region44
      $region43: #{tpu_custom_call.1} parent=11 // pred_region
        _
      $region44: #{tpu_custom_call.1} parent=11 // pred_fallthru
        _
    $region12: #{tpu_custom_call.1} parent=5 // pred_fallthru
      _
    %p319 = scmp.lt.s32.totalorder %s16, 2
    // Predicated region
    $region45: #{tpu_custom_call.1} parent=5 // pred_check
      %p320 = pneg %p319
    $region46: #{tpu_custom_call.1} parent=5 // pred_check_branch
      %322 = sbr.rel (%p320) target = $region48
    $region47: #{tpu_custom_call.1} parent=5 // pred_region
      // Predicated region
      $region49: #{tpu_custom_call.1} parent=47 // pred_check
        %p323 = pneg %p50
      $region50: #{tpu_custom_call.1} parent=47 // pred_check_branch
        %325 = sbr.rel (%p323) target = $region52
      $region51: #{tpu_custom_call.1} parent=47 // pred_region
        %s326 = smul.u32 2, %s24
        %p327 = scmp.lt.s32.totalorder %s23, 1
        %s328 = scalar_select %p327, %s23, 1
        %p329 = scmp.lt.s32.totalorder %s326, 1
        %s330 = scalar_select %p329, %s326, 1
        %s331 = smul.addr %s328, 2
        %s332 = sadd.s32 %s330, %s331
        %s333 = smul.addr %s332, 8
        %s334 = scalar_lea.vmem %s0, %s333
        %s335 = smul.u32 2, %s24
      $region52: #{tpu_custom_call.1} parent=47 // pred_fallthru
        _
      // Predicated region
      $region53: #{tpu_custom_call.1} parent=47 // pred_check
        %p336 = pneg %p78
      $region54: #{tpu_custom_call.1} parent=47 // pred_check_branch
        %338 = sbr.rel (%p336) target = $region56
      $region55: #{tpu_custom_call.1} parent=47 // pred_region
        %s339 = smul.u32 2, %s24
        %p340 = scmp.lt.s32.totalorder %s23, 1
        %s341 = scalar_select %p340, %s23, 1
        %p342 = scmp.lt.s32.totalorder %s339, 1
        %s343 = scalar_select %p342, %s339, 1
        %s344 = smul.addr %s341, 2
        %s345 = sadd.s32 %s343, %s344
        %s346 = smul.addr %s345, 8
        %s347 = scalar_lea.vmem %s1, %s346
        %s348 = smul.u32 2, %s24
      $region56: #{tpu_custom_call.1} parent=47 // pred_fallthru
        _
    $region48: #{tpu_custom_call.1} parent=5 // pred_fallthru
      _
    %p349 = scmp.le.s32.totalorder 1, %s16
    %p350 = scmp.lt.s32.totalorder %s16, 3
    %p351 = pnand %p349, %p350
    %p352 = pneg %p351
    // Predicated region
    $region57: #{tpu_custom_call.1} parent=5 // pred_check
      _
    $region58: #{tpu_custom_call.1} parent=5 // pred_check_branch
      %354 = sbr.rel (%p351) target = $region60
    $region59: #{tpu_custom_call.1} parent=5 // pred_region
      %s355 = ssub.s32 %s16, 1
      %s356 = smul.u32 2, %s26
      %p357 = scmp.lt.s32.totalorder %s25, 1
      %s358 = scalar_select %p357, %s25, 1
      %p359 = scmp.lt.s32.totalorder %s356, 1
      %s360 = scalar_select %p359, %s356, 1
      %s361 = smul.addr %s358, 2
      %s362 = sadd.s32 %s360, %s361
      %s363 = smul.addr %s362, 8
      %s364 = scalar_lea.vmem %s0, %s363
      %p365 = pneg %p56
      %p366 = pneg %p53
      %s367 = smul.u32 2, %s26
      %p368 = scmp.lt.s32.totalorder %s25, 1
      %s369 = scalar_select %p368, %s25, 1
      %p370 = scmp.lt.s32.totalorder %s367, 1
      %s371 = scalar_select %p370, %s367, 1
      %s372 = smul.addr %s369, 2
      %s373 = sadd.s32 %s371, %s372
      %s374 = smul.addr %s373, 8
      %s375 = scalar_lea.vmem %s1, %s374
      %p376 = pneg %p84
      %p377 = pneg %p81
      %p378 = pneg %p105
      %p379 = pneg %p102
      %p380 = pneg %p126
      %p381 = pneg %p123
      %p382 = pneg %p147
      %p383 = pneg %p144
      %p384 = pneg %p168
      %p385 = pneg %p165
      %p386 = pneg %p189
      %p387 = pneg %p186
      %p388 = pneg %p210
      %p389 = pneg %p207
      %p390 = pneg %p231
      %p391 = pneg %p228
      %p392 = pneg %p252
      %p393 = pneg %p249
      %p394 = pneg %p280
      %p395 = pneg %p277
      %s396 = smul.u32 2, %s26
      %p397 = scmp.lt.s32.totalorder %s25, 1
      %s398 = scalar_select %p397, %s25, 1
      %p399 = scmp.lt.s32.totalorder %s396, 1
      %s400 = scalar_select %p399, %s396, 1
      %s401 = smul.addr %s398, 2
      %s402 = sadd.s32 %s400, %s401
      %s403 = smul.addr %s402, 8
      %s404 = scalar_lea.vmem %s10, %s403
      %s405 = smul.u32 2, %s26
      %p406 = scmp.lt.s32.totalorder %s25, 1
      %s407 = scalar_select %p406, %s25, 1
      %p408 = scmp.lt.s32.totalorder %s405, 1
      %s409 = scalar_select %p408, %s405, 1
      %s410 = smul.addr %s407, 2
      %s411 = sadd.s32 %s409, %s410
      %s412 = smul.addr %s411, 8
      %s413 = scalar_lea.vmem %s0, %s412
      %s414 = smul.u32 2, %s26
      %s415 = smul.u32 2, %s26
      %p416 = scmp.lt.s32.totalorder %s25, 1
      %s417 = scalar_select %p416, %s25, 1
      %p418 = scmp.lt.s32.totalorder %s415, 1
      %s419 = scalar_select %p418, %s415, 1
      %s420 = smul.addr %s417, 2
      %s421 = sadd.s32 %s419, %s420
      %s422 = smul.addr %s421, 8
      %s423 = scalar_lea.vmem %s1, %s422
      %s424 = smul.u32 2, %s26
      %s425 = smul.u32 2, %s26
      %p426 = scmp.lt.s32.totalorder %s25, 1
      %s427 = scalar_select %p426, %s25, 1
      %p428 = scmp.lt.s32.totalorder %s425, 1
      %s429 = scalar_select %p428, %s425, 1
      %s430 = smul.addr %s427, 2
      %s431 = sadd.s32 %s429, %s430
      %s432 = smul.addr %s431, 8
      %s433 = scalar_lea.vmem %s10, %s432
      %s434 = smul.u32 2, %s26
      %v435 = vld [vmem:[%s423] sm:$0x1f]
      %v436 = vld [vmem:[%s423 + $0x8] sm:$0x1f]
      %v437 = vld [vmem:[%s2] sm:$0x1f]
      %439 = vset.pattern.permute.xlu0 0
      %440 = vperm.xlu0 %439, %v437
      %v441 = vpop.permute.xlu0 %440
      %v443 = vmul.f32 %v435, %v441
      %v444 = vmul.f32 %v436, %v441
      %v445 = vld [vmem:[%s3] sm:$0x1f]
      %447 = vset.pattern.permute.xlu0 0
      %448 = vperm.xlu0 %447, %v445
      %v449 = vpop.permute.xlu0 %448
      %v451 = vadd.f32 %v443, %v449
      %v452 = vadd.f32 %v444, %v449
      %vm453 = vcmp.ge.f32.partialorder %v451, 0.0
      %vm454 = vcmp.ge.f32.partialorder %v452, 0.0
      %v455 = vmul.f32 %v451, 0.1
      %v456 = vmul.f32 %v452, 0.1
      %v457 = vsel %vm453, %v451, %v455
      %v458 = vsel %vm454, %v452, %v456
      %v459 = vld [vmem:[%s4] sm:$0xff]
      %v460 = vld [vmem:[%s4 + $0x8] sm:$0xff]
      %v461 = vld [vmem:[%s4 + $0x10] sm:$0xff]
      %v462 = vld [vmem:[%s4 + $0x18] sm:$0xff]
      %v463 = vld [vmem:[%s4 + $0x20] sm:$0xff]
      %v464 = vld [vmem:[%s4 + $0x28] sm:$0xff]
      %v465 = vld [vmem:[%s4 + $0x30] sm:$0xff]
      %v466 = vld [vmem:[%s4 + $0x38] sm:$0xff]
      %v467 = vld [vmem:[%s5] sm:$0xff]
      %v468 = vld [vmem:[%s5 + $0x8] sm:$0xff]
      %v469 = vld [vmem:[%s5 + $0x10] sm:$0xff]
      %v470 = vld [vmem:[%s5 + $0x18] sm:$0xff]
      %v471 = vld [vmem:[%s5 + $0x20] sm:$0xff]
      %v472 = vld [vmem:[%s5 + $0x28] sm:$0xff]
      %v473 = vld [vmem:[%s5 + $0x30] sm:$0xff]
      %v474 = vld [vmem:[%s5 + $0x38] sm:$0xff]
      %476 = vset.pattern.permute.xlu0 0
      %477 = vperm.xlu0 %476, %v467
      %v478 = vpop.permute.xlu0 %477
      %481 = vset.pattern.permute.xlu0 0
      %482 = vperm.xlu0 %481, %v468
      %v483 = vpop.permute.xlu0 %482
      %486 = vset.pattern.permute.xlu0 0
      %487 = vperm.xlu0 %486, %v469
      %v488 = vpop.permute.xlu0 %487
      %491 = vset.pattern.permute.xlu0 0
      %492 = vperm.xlu0 %491, %v470
      %v493 = vpop.permute.xlu0 %492
      %496 = vset.pattern.permute.xlu0 0
      %497 = vperm.xlu0 %496, %v471
      %v498 = vpop.permute.xlu0 %497
      %501 = vset.pattern.permute.xlu0 0
      %502 = vperm.xlu0 %501, %v472
      %v503 = vpop.permute.xlu0 %502
      %506 = vset.pattern.permute.xlu0 0
      %507 = vperm.xlu0 %506, %v473
      %v508 = vpop.permute.xlu0 %507
      %511 = vset.pattern.permute.xlu0 0
      %512 = vperm.xlu0 %511, %v474
      %v513 = vpop.permute.xlu0 %512
      %vm515 = vcmask 39936
      %v517 = vsel %vm515, %v459, 0
      %v520 = vsel %vm515, %v460, 0
      %v523 = vsel %vm515, %v461, 0
      %v526 = vsel %vm515, %v462, 0
      %v529 = vsel %vm515, %v463, 0
      %v532 = vsel %vm515, %v464, 0
      %v535 = vsel %vm515, %v465, 0
      %v538 = vsel %vm515, %v466, 0
      %vm540 = vcmask 1044480
      %v542 = vsel %vm540, %v457, 0
      %v545 = vsel %vm540, %v458, 0
      %547 = vmatprep.subr.mxu0 %v545
      %548 = vmatpush1.msra.mxu0 %v542
      %549 = vmatprep.subr.mxu0 0.0
      %550 = vmatpush1.msra.mxu0 0.0
      %551 = vmatprep.subr.mxu0 0.0
      %552 = vmatpush1.msra.mxu0 0.0
      %553 = vmatprep.subr.mxu0 0.0
      %554 = vmatpush1.msra.mxu0 0.0
      %555 = vmatprep.subr.mxu0 0.0
      %556 = vmatpush1.msra.mxu0 0.0
      %557 = vmatprep.subr.mxu0 0.0
      %558 = vmatpush1.msra.mxu0 0.0
      %559 = vmatprep.subr.mxu0 0.0
      %560 = vmatpush1.msra.mxu0 0.0
      %561 = vmatprep.subr.mxu0 0.0
      %562 = vmatpush1.msra.mxu0 0.0
      %563 = vmatprep.subr.mxu0 0.0
      %564 = vmatpush1.msra.mxu0 0.0
      %565 = vmatprep.subr.mxu0 0.0
      %566 = vmatpush1.msra.mxu0 0.0
      %567 = vmatprep.subr.mxu0 0.0
      %568 = vmatpush1.msra.mxu0 0.0
      %569 = vmatprep.subr.mxu0 0.0
      %570 = vmatpush1.msra.mxu0 0.0
      %571 = vmatprep.subr.mxu0 0.0
      %572 = vmatpush1.msra.mxu0 0.0
      %573 = vmatprep.subr.mxu0 0.0
      %574 = vmatpush1.msra.mxu0 0.0
      %575 = vmatprep.subr.mxu0 0.0
      %576 = vmatpush1.msra.mxu0 0.0
      %577 = vmatprep.subr.mxu0 0.0
      %578 = vmatpush1.msra.mxu0 0.0
      %579 = vmatprep.subr.mxu0 0.0
      %580 = vmatpush1.msra.mxu0 0.0
      %581 = vmatprep.subr.mxu0 0.0
      %582 = vmatpush1.msra.mxu0 0.0
      %583 = vmatprep.subr.mxu0 0.0
      %584 = vmatpush1.msra.mxu0 0.0
      %585 = vmatprep.subr.mxu0 0.0
      %586 = vmatpush1.msra.mxu0 0.0
      %587 = vmatprep.subr.mxu0 0.0
      %588 = vmatpush1.msra.mxu0 0.0
      %589 = vmatprep.subr.mxu0 0.0
      %590 = vmatpush1.msra.mxu0 0.0
      %591 = vmatprep.subr.mxu0 0.0
      %592 = vmatpush1.msra.mxu0 0.0
      %593 = vmatprep.subr.mxu0 0.0
      %594 = vmatpush1.msra.mxu0 0.0
      %595 = vmatprep.subr.mxu0 0.0
      %596 = vmatpush1.msra.mxu0 0.0
      %597 = vmatprep.subr.mxu0 0.0
      %598 = vmatpush1.msra.mxu0 0.0
      %599 = vmatprep.subr.mxu0 0.0
      %600 = vmatpush1.msra.mxu0 0.0
      %601 = vmatprep.subr.mxu0 0.0
      %602 = vmatpush1.msra.mxu0 0.0
      %603 = vmatprep.subr.mxu0 0.0
      %604 = vmatpush1.msra.mxu0 0.0
      %605 = vmatprep.subr.mxu0 0.0
      %606 = vmatpush1.msra.mxu0 0.0
      %607 = vmatprep.subr.mxu0 0.0
      %608 = vmatpush1.msra.mxu0 0.0
      %609 = vmatprep.subr.mxu0 0.0
      %610 = vmatpush1.msra.mxu0 0.0
      %611 = vmatprep.mubr.f32.mxu0 0.0
      %612 = vmatmul.mubr.f32.gmra.mrb[0].mxu0 %v517
      %v613 = vpop.f32.mrb[0].mxu0
      %v614 = vadd.f32 %v478, %v613
      %v615 = vpop.f32.mrb[0].mxu0
      %v616 = vadd.f32 %v478, %v615
      %617 = vmatprep.mubr.f32.mxu0 0.0
      %618 = vmatmul.mubr.f32.gmra.mrb[0].mxu0 %v520
      %v619 = vpop.f32.mrb[0].mxu0
      %v620 = vadd.f32 %v483, %v619
      %v621 = vpop.f32.mrb[0].mxu0
      %v622 = vadd.f32 %v483, %v621
      %623 = vmatprep.mubr.f32.mxu0 0.0
      %624 = vmatmul.mubr.f32.gmra.mrb[0].mxu0 %v523
      %v625 = vpop.f32.mrb[0].mxu0
      %v626 = vadd.f32 %v488, %v625
      %v627 = vpop.f32.mrb[0].mxu0
      %v628 = vadd.f32 %v488, %v627
      %629 = vmatprep.mubr.f32.mxu0 0.0
      %630 = vmatmul.mubr.f32.gmra.mrb[0].mxu0 %v526
      %v631 = vpop.f32.mrb[0].mxu0
      %v632 = vadd.f32 %v493, %v631
      %v633 = vpop.f32.mrb[0].mxu0
      %v634 = vadd.f32 %v493, %v633
      %635 = vmatprep.mubr.f32.mxu0 0.0
      %636 = vmatmul.mubr.f32.gmra.mrb[0].mxu0 %v529
      %v637 = vpop.f32.mrb[0].mxu0
      %v638 = vadd.f32 %v498, %v637
      %v639 = vpop.f32.mrb[0].mxu0
      %v640 = vadd.f32 %v498, %v639
      %641 = vmatprep.mubr.f32.mxu0 0.0
      %642 = vmatmul.mubr.f32.gmra.mrb[0].mxu0 %v532
      %v643 = vpop.f32.mrb[0].mxu0
      %v644 = vadd.f32 %v503, %v643
      %v645 = vpop.f32.mrb[0].mxu0
      %v646 = vadd.f32 %v503, %v645
      %647 = vmatprep.mubr.f32.mxu0 0.0
      %648 = vmatmul.mubr.f32.gmra.mrb[0].mxu0 %v535
      %v649 = vpop.f32.mrb[0].mxu0
      %v650 = vadd.f32 %v508, %v649
      %v651 = vpop.f32.mrb[0].mxu0
      %v652 = vadd.f32 %v508, %v651
      %653 = vmatprep.mubr.f32.mxu0 0.0
      %654 = vmatmul.mubr.f32.gmra.mrb[0].mxu0 %v538
      %v655 = vpop.f32.mrb[0].mxu0
      %v656 = vadd.f32 %v513, %v655
      %v657 = vpop.f32.mrb[0].mxu0
      %v658 = vadd.f32 %v513, %v657
      %659 = vdwg.mxu0
      %vm660 = vcmp.ge.f32.partialorder %v614, 0.0
      %vm661 = vcmp.ge.f32.partialorder %v616, 0.0
      %vm662 = vcmp.ge.f32.partialorder %v620, 0.0
      %vm663 = vcmp.ge.f32.partialorder %v622, 0.0
      %vm664 = vcmp.ge.f32.partialorder %v626, 0.0
      %vm665 = vcmp.ge.f32.partialorder %v628, 0.0
      %vm666 = vcmp.ge.f32.partialorder %v632, 0.0
      %vm667 = vcmp.ge.f32.partialorder %v634, 0.0
      %vm668 = vcmp.ge.f32.partialorder %v638, 0.0
      %vm669 = vcmp.ge.f32.partialorder %v640, 0.0
      %vm670 = vcmp.ge.f32.partialorder %v644, 0.0
      %vm671 = vcmp.ge.f32.partialorder %v646, 0.0
      %vm672 = vcmp.ge.f32.partialorder %v650, 0.0
      %vm673 = vcmp.ge.f32.partialorder %v652, 0.0
      %vm674 = vcmp.ge.f32.partialorder %v656, 0.0
      %vm675 = vcmp.ge.f32.partialorder %v658, 0.0
      %v676 = vmul.f32 %v614, 0.1
      %v677 = vmul.f32 %v616, 0.1
      %v678 = vmul.f32 %v620, 0.1
      %v679 = vmul.f32 %v622, 0.1
      %v680 = vmul.f32 %v626, 0.1
      %v681 = vmul.f32 %v628, 0.1
      %v682 = vmul.f32 %v632, 0.1
      %v683 = vmul.f32 %v634, 0.1
      %v684 = vmul.f32 %v638, 0.1
      %v685 = vmul.f32 %v640, 0.1
      %v686 = vmul.f32 %v644, 0.1
      %v687 = vmul.f32 %v646, 0.1
      %v688 = vmul.f32 %v650, 0.1
      %v689 = vmul.f32 %v652, 0.1
      %v690 = vmul.f32 %v656, 0.1
      %v691 = vmul.f32 %v658, 0.1
      %v692 = vsel %vm660, %v614, %v676
      %v693 = vsel %vm661, %v616, %v677
      %v694 = vsel %vm662, %v620, %v678
      %v695 = vsel %vm663, %v622, %v679
      %v696 = vsel %vm664, %v626, %v680
      %v697 = vsel %vm665, %v628, %v681
      %v698 = vsel %vm666, %v632, %v682
      %v699 = vsel %vm667, %v634, %v683
      %v700 = vsel %vm668, %v638, %v684
      %v701 = vsel %vm669, %v640, %v685
      %v702 = vsel %vm670, %v644, %v686
      %v703 = vsel %vm671, %v646, %v687
      %v704 = vsel %vm672, %v650, %v688
      %v705 = vsel %vm673, %v652, %v689
      %v706 = vsel %vm674, %v656, %v690
      %v707 = vsel %vm675, %v658, %v691
      %v708 = vld [vmem:[%s6] sm:$0x1f]
      %v709 = vld [vmem:[%s7] sm:$0x1f]
      %711 = vset.pattern.permute.xlu0 0
      %712 = vperm.xlu0 %711, %v709
      %v713 = vpop.permute.xlu0 %712
      %vm715 = vcmask 261120
      %v717 = vsel %vm715, %v708, 0
      %719 = vmatprep.subr.mxu0 %v693
      %720 = vmatpush1.msra.mxu0 %v692
      %721 = vmatprep.subr.mxu0 %v695
      %722 = vmatpush1.msra.mxu0 %v694
      %723 = vmatprep.subr.mxu0 %v697
      %724 = vmatpush1.msra.mxu0 %v696
      %725 = vmatprep.subr.mxu0 %v699
      %726 = vmatpush1.msra.mxu0 %v698
      %727 = vmatprep.subr.mxu0 0.0
      %728 = vmatpush1.msra.mxu0 0.0
      %729 = vmatprep.subr.mxu0 0.0
      %730 = vmatpush1.msra.mxu0 0.0
      %731 = vmatprep.subr.mxu0 0.0
      %732 = vmatpush1.msra.mxu0 0.0
      %733 = vmatprep.subr.mxu0 0.0
      %734 = vmatpush1.msra.mxu0 0.0
      %735 = vmatprep.subr.mxu0 0.0
      %736 = vmatpush1.msra.mxu0 0.0
      %737 = vmatprep.subr.mxu0 0.0
      %738 = vmatpush1.msra.mxu0 0.0
      %739 = vmatprep.subr.mxu0 0.0
      %740 = vmatpush1.msra.mxu0 0.0
      %741 = vmatprep.subr.mxu0 0.0
      %742 = vmatpush1.msra.mxu0 0.0
      %743 = vmatprep.subr.mxu0 0.0
      %744 = vmatpush1.msra.mxu0 0.0
      %745 = vmatprep.subr.mxu0 0.0
      %746 = vmatpush1.msra.mxu0 0.0
      %747 = vmatprep.subr.mxu0 0.0
      %748 = vmatpush1.msra.mxu0 0.0
      %749 = vmatprep.subr.mxu0 0.0
      %750 = vmatpush1.msra.mxu0 0.0
      %751 = vmatprep.subr.mxu0 0.0
      %752 = vmatpush1.msra.mxu0 0.0
      %753 = vmatprep.subr.mxu0 0.0
      %754 = vmatpush1.msra.mxu0 0.0
      %755 = vmatprep.subr.mxu0 0.0
      %756 = vmatpush1.msra.mxu0 0.0
      %757 = vmatprep.subr.mxu0 0.0
      %758 = vmatpush1.msra.mxu0 0.0
      %759 = vmatprep.subr.mxu0 0.0
      %760 = vmatpush1.msra.mxu0 0.0
      %761 = vmatprep.subr.mxu0 0.0
      %762 = vmatpush1.msra.mxu0 0.0
      %763 = vmatprep.subr.mxu0 0.0
      %764 = vmatpush1.msra.mxu0 0.0
      %765 = vmatprep.subr.mxu0 0.0
      %766 = vmatpush1.msra.mxu0 0.0
      %767 = vmatprep.subr.mxu0 0.0
      %768 = vmatpush1.msra.mxu0 0.0
      %769 = vmatprep.subr.mxu0 0.0
      %770 = vmatpush1.msra.mxu0 0.0
      %771 = vmatprep.subr.mxu0 0.0
      %772 = vmatpush1.msra.mxu0 0.0
      %773 = vmatprep.subr.mxu0 0.0
      %774 = vmatpush1.msra.mxu0 0.0
      %775 = vmatprep.subr.mxu0 0.0
      %776 = vmatpush1.msra.mxu0 0.0
      %777 = vmatprep.subr.mxu0 0.0
      %778 = vmatpush1.msra.mxu0 0.0
      %779 = vmatprep.subr.mxu0 0.0
      %780 = vmatpush1.msra.mxu0 0.0
      %781 = vmatprep.subr.mxu0 0.0
      %782 = vmatpush1.msra.mxu0 0.0
      %783 = vmatprep.mubr.f32.mxu0 0.0
      %784 = vmatmul.mubr.f32.gmra.mrb[0].mxu0 %v717
      %v785 = vpop.f32.mrb[0].mxu0
      %v786 = vadd.f32 %v713, %v785
      %v787 = vpop.f32.mrb[0].mxu0
      %v788 = vadd.f32 %v713, %v787
      %789 = vdwg.mxu0
      %v790 = vld [vmem:[%s8] sm:$0x1f]
      %v791 = vld [vmem:[%s9] sm:$0x1f]
      %793 = vset.pattern.permute.xlu0 0
      %794 = vperm.xlu0 %793, %v791
      %v795 = vpop.permute.xlu0 %794
      %v798 = vsel %vm715, %v790, 0
      %800 = vmatprep.subr.mxu0 %v701
      %801 = vmatpush1.msra.mxu0 %v700
      %802 = vmatprep.subr.mxu0 %v703
      %803 = vmatpush1.msra.mxu0 %v702
      %804 = vmatprep.subr.mxu0 %v705
      %805 = vmatpush1.msra.mxu0 %v704
      %806 = vmatprep.subr.mxu0 %v707
      %807 = vmatpush1.msra.mxu0 %v706
      %808 = vmatprep.subr.mxu0 0.0
      %809 = vmatpush1.msra.mxu0 0.0
      %810 = vmatprep.subr.mxu0 0.0
      %811 = vmatpush1.msra.mxu0 0.0
      %812 = vmatprep.subr.mxu0 0.0
      %813 = vmatpush1.msra.mxu0 0.0
      %814 = vmatprep.subr.mxu0 0.0
      %815 = vmatpush1.msra.mxu0 0.0
      %816 = vmatprep.subr.mxu0 0.0
      %817 = vmatpush1.msra.mxu0 0.0
      %818 = vmatprep.subr.mxu0 0.0
      %819 = vmatpush1.msra.mxu0 0.0
      %820 = vmatprep.subr.mxu0 0.0
      %821 = vmatpush1.msra.mxu0 0.0
      %822 = vmatprep.subr.mxu0 0.0
      %823 = vmatpush1.msra.mxu0 0.0
      %824 = vmatprep.subr.mxu0 0.0
      %825 = vmatpush1.msra.mxu0 0.0
      %826 = vmatprep.subr.mxu0 0.0
      %827 = vmatpush1.msra.mxu0 0.0
      %828 = vmatprep.subr.mxu0 0.0
      %829 = vmatpush1.msra.mxu0 0.0
      %830 = vmatprep.subr.mxu0 0.0
      %831 = vmatpush1.msra.mxu0 0.0
      %832 = vmatprep.subr.mxu0 0.0
      %833 = vmatpush1.msra.mxu0 0.0
      %834 = vmatprep.subr.mxu0 0.0
      %835 = vmatpush1.msra.mxu0 0.0
      %836 = vmatprep.subr.mxu0 0.0
      %837 = vmatpush1.msra.mxu0 0.0
      %838 = vmatprep.subr.mxu0 0.0
      %839 = vmatpush1.msra.mxu0 0.0
      %840 = vmatprep.subr.mxu0 0.0
      %841 = vmatpush1.msra.mxu0 0.0
      %842 = vmatprep.subr.mxu0 0.0
      %843 = vmatpush1.msra.mxu0 0.0
      %844 = vmatprep.subr.mxu0 0.0
      %845 = vmatpush1.msra.mxu0 0.0
      %846 = vmatprep.subr.mxu0 0.0
      %847 = vmatpush1.msra.mxu0 0.0
      %848 = vmatprep.subr.mxu0 0.0
      %849 = vmatpush1.msra.mxu0 0.0
      %850 = vmatprep.subr.mxu0 0.0
      %851 = vmatpush1.msra.mxu0 0.0
      %852 = vmatprep.subr.mxu0 0.0
      %853 = vmatpush1.msra.mxu0 0.0
      %854 = vmatprep.subr.mxu0 0.0
      %855 = vmatpush1.msra.mxu0 0.0
      %856 = vmatprep.subr.mxu0 0.0
      %857 = vmatpush1.msra.mxu0 0.0
      %858 = vmatprep.subr.mxu0 0.0
      %859 = vmatpush1.msra.mxu0 0.0
      %860 = vmatprep.subr.mxu0 0.0
      %861 = vmatpush1.msra.mxu0 0.0
      %862 = vmatprep.subr.mxu0 0.0
      %863 = vmatpush1.msra.mxu0 0.0
      %864 = vmatprep.mubr.f32.mxu0 0.0
      %865 = vmatmul.mubr.f32.gmra.mrb[0].mxu0 %v798
      %v866 = vpop.f32.mrb[0].mxu0
      %v867 = vadd.f32 %v795, %v866
      %v868 = vpop.f32.mrb[0].mxu0
      %v869 = vadd.f32 %v795, %v868
      %870 = vdwg.mxu0
      %v871 = vld [vmem:[%s413] sm:$0x1f]
      %v872 = vld [vmem:[%s413 + $0x8] sm:$0x1f]
      %v873 = vmul.f32 %v871, %v786
      %v874 = vmul.f32 %v872, %v788
      %v875 = vadd.f32 %v873, %v871
      %v876 = vadd.f32 %v874, %v872
      %v877 = vadd.f32 %v875, %v867
      %v878 = vadd.f32 %v876, %v869
      %879 = vst [vmem:[%s433] sm:$0x1f] %v877
      %880 = vst [vmem:[%s433 + $0x8] sm:$0x1f] %v878
      %s881 = smul.u32 2, %s26
      %p882 = scmp.lt.s32.totalorder %s25, 1
      %s883 = scalar_select %p882, %s25, 1
      %p884 = scmp.lt.s32.totalorder %s881, 1
      %s885 = scalar_select %p884, %s881, 1
      %s886 = smul.addr %s883, 2
      %s887 = sadd.s32 %s885, %s886
      %s888 = smul.addr %s887, 8
      %s889 = scalar_lea.vmem %s10, %s888
      // Predicated region
      $region61: #{tpu_custom_call.1} parent=59 // pred_check
        %p890 = pneg %p277
      $region62: #{tpu_custom_call.1} parent=59 // pred_check_branch
        %892 = sbr.rel (%p890) target = $region64
      $region63: #{tpu_custom_call.1} parent=59 // pred_region
        %s893 = smul.u32 2, %s26
      $region64: #{tpu_custom_call.1} parent=59 // pred_fallthru
        _
    $region60: #{tpu_custom_call.1} parent=5 // pred_fallthru
      _
    %p894 = scmp.le.s32.totalorder 2, %s16
    // Predicated region
    $region65: #{tpu_custom_call.1} parent=5 // pred_check
      %p895 = pneg %p894
    $region66: #{tpu_custom_call.1} parent=5 // pred_check_branch
      %897 = sbr.rel (%p895) target = $region68
    $region67: #{tpu_custom_call.1} parent=5 // pred_region
      %s898 = ssub.s32 %s16, 2
      // Predicated region
      $region69: #{tpu_custom_call.1} parent=67 // pred_check
        %p899 = pneg %p283
      $region70: #{tpu_custom_call.1} parent=67 // pred_check_branch
        %901 = sbr.rel (%p899) target = $region72
      $region71: #{tpu_custom_call.1} parent=67 // pred_region
        %s902 = smul.u32 2, %s28
        %p903 = scmp.lt.s32.totalorder %s27, 1
        %s904 = scalar_select %p903, %s27, 1
        %p905 = scmp.lt.s32.totalorder %s902, 1
        %s906 = scalar_select %p905, %s902, 1
        %s907 = smul.addr %s904, 2
        %s908 = sadd.s32 %s906, %s907
        %s909 = smul.addr %s908, 8
        %s910 = scalar_lea.vmem %s10, %s909
      $region72: #{tpu_custom_call.1} parent=67 // pred_fallthru
        _
    $region68: #{tpu_custom_call.1} parent=5 // pred_fallthru
      _
  $region6: #{tpu_custom_call.1} parent=0 // loop_footer
    %s20 = sadd.s32 1, %s16
  $region7: #{tpu_custom_call.1} parent=0 // loop_footer_branch
    %15 = sbr.rel target = $region3
  $region8: #{tpu_custom_call.1} parent=0 // loop_exit
    _

</llo_original>
